<compile_context>
chip_gen: v5e
topology: v5e:2x2
jax: 0.10.0
libtpu: 0.0.40
codegen_flags: <defaults>
</compile_context>

<pallas_src>
import functools

import jax
import jax.numpy as jnp
from jax.experimental import pallas as pl
from jax.experimental.pallas import tpu as pltpu

COMPUTE_DTYPE = jnp.bfloat16  # matmul operand dtype (accumulation is f32)


def _round_up(n, m):
    return ((n + m - 1) // m) * m


def mlp_kernel(x_ref, w1_ref, b1_ref, w2_ref, b2_ref,
               w3_ref, b3_ref, w4_ref, b4_ref, o_ref):
    # Fully fused 4-layer MLP on one resident batch tile.
    # x arrives in its native dtype (typically f32) and is cast to bf16 on the
    # VPU here (free filler under the DMA bound). Matmuls take bf16 operands
    # and accumulate in f32; bias adds + ReLU run in f32, then cast back to
    # bf16 for the next MXU pass.
    x = x_ref[...].astype(COMPUTE_DTYPE)

    h = jnp.dot(x, w1_ref[...], preferred_element_type=jnp.float32) + b1_ref[...]
    h = jnp.maximum(h, 0.0).astype(COMPUTE_DTYPE)

    h = jnp.dot(h, w2_ref[...], preferred_element_type=jnp.float32) + b2_ref[...]
    h = jnp.maximum(h, 0.0).astype(COMPUTE_DTYPE)

    h = jnp.dot(h, w3_ref[...], preferred_element_type=jnp.float32) + b3_ref[...]
    h = jnp.maximum(h, 0.0).astype(COMPUTE_DTYPE)

    out = jnp.dot(h, w4_ref[...], preferred_element_type=jnp.float32) + b4_ref[...]
    o_ref[...] = out.astype(o_ref.dtype)


@functools.partial(jax.jit, static_argnames=("tile_b",))
def _model_forward_impl(x, params, *, tile_b):
    B, D = x.shape
    C = params["w4"].shape[1]

    # bf16 matmul operands for the (tiny, resident) weights; biases stay f32
    # (added to the f32 accumulator inside the kernel).
    w1 = params["w1"].astype(COMPUTE_DTYPE)
    w2 = params["w2"].astype(COMPUTE_DTYPE)
    w3 = params["w3"].astype(COMPUTE_DTYPE)
    w4 = params["w4"].astype(COMPUTE_DTYPE)
    b1 = params["b1"].astype(jnp.float32)
    b2 = params["b2"].astype(jnp.float32)
    b3 = params["b3"].astype(jnp.float32)
    b4 = params["b4"].astype(jnp.float32)

    # Batch tile: a multiple of 8 sublanes, large enough to amortize per-step
    # pipeline overhead, but capped so the grid has >=2 steps whenever the
    # batch allows it (lets the 'parallel' axis shard across both v7x TCs).
    tb_req = _round_up(max(int(tile_b), 8), 8)
    half_b = _round_up(max((B + 1) // 2, 1), 8)
    tb = max(8, min(tb_req, half_b))

    # Ragged batch: grid = ceil(B / tb); Pallas masks the partially
    # out-of-bounds last block (reads are garbage rows, writes are dropped) —
    # safe here because rows are independent. No wrapper-side pad of x.
    grid = (pl.cdiv(B, tb),)

    def full(shape):
        # Weights/biases: same block every grid step (resident in VMEM).
        return pl.BlockSpec(shape, lambda i: (0,) * len(shape))

    out = pl.pallas_call(
        mlp_kernel,
        out_shape=jax.ShapeDtypeStruct((B, C), jnp.float32),
        grid_spec=pltpu.PrefetchScalarGridSpec(
            num_scalar_prefetch=0,
            grid=grid,
            in_specs=[
                pl.BlockSpec((tb, D), lambda i: (i, 0)),
                full(w1.shape), full(b1.shape),
                full(w2.shape), full(b2.shape),
                full(w3.shape), full(b3.shape),
                full(w4.shape), full(b4.shape),
            ],
            out_specs=pl.BlockSpec((tb, C), lambda i: (i, 0)),
        ),
        compiler_params=pltpu.CompilerParams(
            dimension_semantics=("parallel",),
        ),
    )(x, w1, b1, w2, b2, w3, b3, w4, b4)

    return out


def model_forward(x, params, *, tile_b=2048):
    """x: (B, D) float (f32 or bf16). params: dict of weights/biases.

    Returns (B, C) float32 logits matching the PyTorch module's forward.
    """
    return _model_forward_impl(x, params, tile_b=int(tile_b))


def init_params(key, input_dim, num_classes=1):
    """Deterministic synthetic init (shapes match the PyTorch module)."""
    dims = [(input_dim, 128), (128, 64), (64, 32), (32, num_classes)]
    params = {}
    for idx, (din, dout) in enumerate(dims, start=1):
        key, kw, kb = jax.random.split(key, 3)
        scale = 1.0 / jnp.sqrt(jnp.float32(din))
        params[f"w{idx}"] = jax.random.uniform(
            kw, (din, dout), jnp.float32, -scale, scale)
        # biases kept 2D (1, dout) for TPU-friendly broadcasting in the kernel
        params[f"b{idx}"] = jax.random.uniform(
            kb, (1, dout), jnp.float32, -scale, scale)
    return params


def reference_forward(x, p):
    h = jnp.maximum(x @ p["w1"] + p["b1"], 0.0)
    h = jnp.maximum(h @ p["w2"] + p["b2"], 0.0)
    h = jnp.maximum(h @ p["w3"] + p["b3"], 0.0)
    return h @ p["w4"] + p["b4"]


if __name__ == "__main__":
    key = jax.random.PRNGKey(0)
    input_dim = 32
    num_classes = 1

    kx, kp, kx2 = jax.random.split(key, 3)
    params = init_params(kp, input_dim, num_classes)

    # Main check (batch multiple of 8).
    batch = 16
    x = jax.random.normal(kx, (batch, input_dim), dtype=jnp.float32)
    out = jax.block_until_ready(model_forward(x, params))
    ref = reference_forward(x, params)
    assert out.shape == (batch, num_classes)
    # bf16 matmul operands -> compare to the f32 reference at loose tolerance.
    assert jnp.allclose(out, ref, atol=5e-2, rtol=5e-2), float(
        jnp.max(jnp.abs(out - ref)))

    # Ragged-batch check (exercises the masked last-block path, no padding).
    batch2 = 13
    x2 = jax.random.normal(kx2, (batch2, input_dim), dtype=jnp.float32)
    out2 = jax.block_until_ready(model_forward(x2, params))
    ref2 = reference_forward(x2, params)
    assert out2.shape == (batch2, num_classes)
    assert jnp.allclose(out2, ref2, atol=5e-2, rtol=5e-2), float(
        jnp.max(jnp.abs(out2 - ref2)))

    print("KERNEL_OK")
</pallas_src>

<mosaic_0001>
module attributes {stable_mosaic.version = 11 : i64} {
  func.func @mlp_kernel(%arg0: i32, %arg1: memref<8x32xf32, #tpu.memory_space<vmem>>, %arg2: memref<32x128xbf16, #tpu.memory_space<vmem>>, %arg3: memref<1x128xf32, #tpu.memory_space<vmem>>, %arg4: memref<128x64xbf16, #tpu.memory_space<vmem>>, %arg5: memref<1x64xf32, #tpu.memory_space<vmem>>, %arg6: memref<64x32xbf16, #tpu.memory_space<vmem>>, %arg7: memref<1x32xf32, #tpu.memory_space<vmem>>, %arg8: memref<32x1xbf16, #tpu.memory_space<vmem>>, %arg9: memref<1x1xf32, #tpu.memory_space<vmem>>, %arg10: memref<8x1xf32, #tpu.memory_space<vmem>>) attributes {dimension_semantics = [#tpu.dimension_semantics<parallel>], iteration_bounds = array<i64: 2>, scalar_prefetch = 0 : i64, scratch_operands = 0 : i64, tpu.core_type = #tpu.core_type<tc>, window_params = [{transform_indices = @transform_0, window_bounds = array<i64: 8, 32>}, {pipeline_mode = #tpu.pipeline_mode<synchronous>, transform_indices = @transform_1, window_bounds = array<i64: 32, 128>}, {pipeline_mode = #tpu.pipeline_mode<synchronous>, transform_indices = @transform_2, window_bounds = array<i64: 1, 128>}, {pipeline_mode = #tpu.pipeline_mode<synchronous>, transform_indices = @transform_3, window_bounds = array<i64: 128, 64>}, {pipeline_mode = #tpu.pipeline_mode<synchronous>, transform_indices = @transform_4, window_bounds = array<i64: 1, 64>}, {pipeline_mode = #tpu.pipeline_mode<synchronous>, transform_indices = @transform_5, window_bounds = array<i64: 64, 32>}, {pipeline_mode = #tpu.pipeline_mode<synchronous>, transform_indices = @transform_6, window_bounds = array<i64: 1, 32>}, {pipeline_mode = #tpu.pipeline_mode<synchronous>, transform_indices = @transform_7, window_bounds = array<i64: 32, 1>}, {pipeline_mode = #tpu.pipeline_mode<synchronous>, transform_indices = @transform_8, window_bounds = array<i64: 1, 1>}, {transform_indices = @transform_9, window_bounds = array<i64: 8, 1>}]} {
    %c0 = arith.constant 0 : index
    %c0_0 = arith.constant 0 : index
    %0 = vector.load %arg1[%c0, %c0_0] : memref<8x32xf32, #tpu.memory_space<vmem>>, vector<8x32xf32>
    %1 = arith.truncf %0 : vector<8x32xf32> to vector<8x32xbf16>
    %c0_1 = arith.constant 0 : index
    %c0_2 = arith.constant 0 : index
    %2 = vector.load %arg2[%c0_1, %c0_2] : memref<32x128xbf16, #tpu.memory_space<vmem>>, vector<32x128xbf16>
    %cst = arith.constant dense<0.000000e+00> : vector<8x128xf32>
    %3 = tpu.matmul %1, %2, %cst {dimension_numbers = #tpu.dot_dimension_numbers<[1], [0], [0], [1], [0, 0, 1, 1], [], []>} : vector<8x32xbf16>, vector<32x128xbf16>, vector<8x128xf32> -> vector<8x128xf32>
    %c0_3 = arith.constant 0 : index
    %c0_4 = arith.constant 0 : index
    %4 = vector.load %arg3[%c0_3, %c0_4] : memref<1x128xf32, #tpu.memory_space<vmem>>, vector<1x128xf32>
    %5 = vector.broadcast %4 : vector<1x128xf32> to vector<8x128xf32>
    %6 = arith.addf %3, %5 : vector<8x128xf32>
    %cst_5 = arith.constant 0.000000e+00 : f32
    %7 = vector.broadcast %cst_5 : f32 to vector<8x128xf32>
    %8 = arith.maximumf %6, %7 : vector<8x128xf32>
    %9 = arith.truncf %8 : vector<8x128xf32> to vector<8x128xbf16>
    %c0_6 = arith.constant 0 : index
    %c0_7 = arith.constant 0 : index
    %10 = vector.load %arg4[%c0_6, %c0_7] : memref<128x64xbf16, #tpu.memory_space<vmem>>, vector<128x64xbf16>
    %cst_8 = arith.constant dense<0.000000e+00> : vector<8x64xf32>
    %11 = tpu.matmul %9, %10, %cst_8 {dimension_numbers = #tpu.dot_dimension_numbers<[1], [0], [0], [1], [0, 0, 1, 1], [], []>} : vector<8x128xbf16>, vector<128x64xbf16>, vector<8x64xf32> -> vector<8x64xf32>
    %c0_9 = arith.constant 0 : index
    %c0_10 = arith.constant 0 : index
    %12 = vector.load %arg5[%c0_9, %c0_10] : memref<1x64xf32, #tpu.memory_space<vmem>>, vector<1x64xf32>
    %13 = vector.broadcast %12 : vector<1x64xf32> to vector<8x64xf32>
    %14 = arith.addf %11, %13 : vector<8x64xf32>
    %cst_11 = arith.constant 0.000000e+00 : f32
    %15 = vector.broadcast %cst_11 : f32 to vector<8x64xf32>
    %16 = arith.maximumf %14, %15 : vector<8x64xf32>
    %17 = arith.truncf %16 : vector<8x64xf32> to vector<8x64xbf16>
    %c0_12 = arith.constant 0 : index
    %c0_13 = arith.constant 0 : index
    %18 = vector.load %arg6[%c0_12, %c0_13] : memref<64x32xbf16, #tpu.memory_space<vmem>>, vector<64x32xbf16>
    %cst_14 = arith.constant dense<0.000000e+00> : vector<8x32xf32>
    %19 = tpu.matmul %17, %18, %cst_14 {dimension_numbers = #tpu.dot_dimension_numbers<[1], [0], [0], [1], [0, 0, 1, 1], [], []>} : vector<8x64xbf16>, vector<64x32xbf16>, vector<8x32xf32> -> vector<8x32xf32>
    %c0_15 = arith.constant 0 : index
    %c0_16 = arith.constant 0 : index
    %20 = vector.load %arg7[%c0_15, %c0_16] : memref<1x32xf32, #tpu.memory_space<vmem>>, vector<1x32xf32>
    %21 = vector.broadcast %20 : vector<1x32xf32> to vector<8x32xf32>
    %22 = arith.addf %19, %21 : vector<8x32xf32>
    %cst_17 = arith.constant 0.000000e+00 : f32
    %23 = vector.broadcast %cst_17 : f32 to vector<8x32xf32>
    %24 = arith.maximumf %22, %23 : vector<8x32xf32>
    %25 = arith.truncf %24 : vector<8x32xf32> to vector<8x32xbf16>
    %c0_18 = arith.constant 0 : index
    %c0_19 = arith.constant 0 : index
    %26 = vector.load %arg8[%c0_18, %c0_19] : memref<32x1xbf16, #tpu.memory_space<vmem>>, vector<32x1xbf16>
    %cst_20 = arith.constant dense<0.000000e+00> : vector<8x1xf32>
    %27 = tpu.matmul %25, %26, %cst_20 {dimension_numbers = #tpu.dot_dimension_numbers<[1], [0], [0], [1], [0, 0, 1, 1], [], []>} : vector<8x32xbf16>, vector<32x1xbf16>, vector<8x1xf32> -> vector<8x1xf32>
    %c0_21 = arith.constant 0 : index
    %c0_22 = arith.constant 0 : index
    %28 = vector.load %arg9[%c0_21, %c0_22] : memref<1x1xf32, #tpu.memory_space<vmem>>, vector<1x1xf32>
    %29 = vector.broadcast %28 : vector<1x1xf32> to vector<8x1xf32>
    %30 = arith.addf %27, %29 : vector<8x1xf32>
    %c0_23 = arith.constant 0 : index
    %c0_24 = arith.constant 0 : index
    %31 = vector.load %arg10[%c0_23, %c0_24] : memref<8x1xf32, #tpu.memory_space<vmem>>, vector<8x1xf32>
    tpu.vector_store %arg10[%c0_23, %c0_24], %30 {strides = array<i32>} : memref<8x1xf32, #tpu.memory_space<vmem>>, vector<8x1xf32>,
    return
  }
  func.func @transform_0(%arg0: i32) -> (i32, i32) {
    %c0_i32 = arith.constant 0 : i32
    %c0_i32_0 = arith.constant 0 : i32
    return %arg0, %c0_i32 : i32, i32
  }
  func.func @transform_1(%arg0: i32) -> (i32, i32) {
    %c0_i32 = arith.constant 0 : i32
    %c0_i32_0 = arith.constant 0 : i32
    %c0_i32_1 = arith.constant 0 : i32
    return %c0_i32, %c0_i32_0 : i32, i32
  }
  func.func @transform_2(%arg0: i32) -> (i32, i32) {
    %c0_i32 = arith.constant 0 : i32
    %c0_i32_0 = arith.constant 0 : i32
    %c0_i32_1 = arith.constant 0 : i32
    return %c0_i32, %c0_i32_0 : i32, i32
  }
  func.func @transform_3(%arg0: i32) -> (i32, i32) {
    %c0_i32 = arith.constant 0 : i32
    %c0_i32_0 = arith.constant 0 : i32
    %c0_i32_1 = arith.constant 0 : i32
    return %c0_i32, %c0_i32_0 : i32, i32
  }
  func.func @transform_4(%arg0: i32) -> (i32, i32) {
    %c0_i32 = arith.constant 0 : i32
    %c0_i32_0 = arith.constant 0 : i32
    %c0_i32_1 = arith.constant 0 : i32
    return %c0_i32, %c0_i32_0 : i32, i32
  }
  func.func @transform_5(%arg0: i32) -> (i32, i32) {
    %c0_i32 = arith.constant 0 : i32
    %c0_i32_0 = arith.constant 0 : i32
    %c0_i32_1 = arith.constant 0 : i32
    return %c0_i32, %c0_i32_0 : i32, i32
  }
  func.func @transform_6(%arg0: i32) -> (i32, i32) {
    %c0_i32 = arith.constant 0 : i32
    %c0_i32_0 = arith.constant 0 : i32
    %c0_i32_1 = arith.constant 0 : i32
    return %c0_i32, %c0_i32_0 : i32, i32
  }
  func.func @transform_7(%arg0: i32) -> (i32, i32) {
    %c0_i32 = arith.constant 0 : i32
    %c0_i32_0 = arith.constant 0 : i32
    %c0_i32_1 = arith.constant 0 : i32
    return %c0_i32, %c0_i32_0 : i32, i32
  }
  func.func @transform_8(%arg0: i32) -> (i32, i32) {
    %c0_i32 = arith.constant 0 : i32
    %c0_i32_0 = arith.constant 0 : i32
    %c0_i32_1 = arith.constant 0 : i32
    return %c0_i32, %c0_i32_0 : i32, i32
  }
  func.func @transform_9(%arg0: i32) -> (i32, i32) {
    %c0_i32 = arith.constant 0 : i32
    %c0_i32_0 = arith.constant 0 : i32
    return %arg0, %c0_i32 : i32, i32
  }
}

</mosaic_0001>

<llo_original>
// kernel: _model_forward_impl.1
$region0: #{_model_forward_impl.1}
  #allocation0 [shape = 'u32[]', space=smem, size = 0x4, offset = 0x4, fixed_abs, tag = 'smem constant byte address 0x4 - core index']
  #allocation1 [shape = 'u32[72,128]{1,0:T(1,128)}', space=vmem, size = 0x9000, scoped, tag = 'internal scratch']
  #allocation2 [shape = 'f32[1,1]{1,0:T(1,128)S(1)}', space=vmem, size = 0x200, scoped, tag = 'scoped memory for _model_forward_impl.1']
  %s0 = inlined_call_operand.vmem [shape: f32[16,32], index: 0, kind: input, shape index: {}]
  %s1 = inlined_call_operand.vmem [shape: bf16[32,128], index: 1, kind: input, shape index: {}]
  %s2 = inlined_call_operand.vmem [shape: f32[1,128], index: 2, kind: input, shape index: {}]
  %s3 = inlined_call_operand.vmem [shape: bf16[128,64], index: 3, kind: input, shape index: {}]
  %s4 = inlined_call_operand.vmem [shape: f32[1,64], index: 4, kind: input, shape index: {}]
  %s5 = inlined_call_operand.vmem [shape: bf16[64,32], index: 5, kind: input, shape index: {}]
  %s6 = inlined_call_operand.vmem [shape: f32[1,32], index: 6, kind: input, shape index: {}]
  %s7 = inlined_call_operand.vmem [shape: bf16[32,1], index: 7, kind: input, shape index: {}]
  %s8 = inlined_call_operand.<no memory space> [shape: f32[1,1], index: 8, kind: input, shape index: {}]
  %s9 = inlined_call_operand.vmem [shape: f32[16,1], index: 9, kind: output, shape index: {}]
  %s10 = sld [smem:[#allocation0]]
  $region69: #{_model_forward_impl.1} parent=0
    _
  %s12 = ssub.s32 1, %s10
  %s13 = scalar_select 0, %s12, %s10
  %v14 = vstv %s8
  %15 = vst [vmem:[#allocation2] sm:$0x1] %v14
  loop: start=0, step=1, limit=4
  $region2: #{_model_forward_impl.1} parent=0 // loop_pre_header
    _
  $region3: #{_model_forward_impl.1} parent=0 // loop_header
    %s17 = sphi 0, %s21
    %p18 = scmp.ge.s32.totalorder %s17, 4
    %s27 = sphi 0, %s29
    %s30 = sphi 0, %s27
    %s31 = sphi 0, %s30
    %s47 = sphi 0, %s31
    %s51 = sphi 0, %s51
    %s53 = sphi 0, %s51
    %s54 = sphi 0, %s53
    %s68 = sphi 0, %s54
    %s72 = sphi 0, %s72
    %s74 = sphi 0, %s72
    %s75 = sphi 0, %s74
    %s89 = sphi 0, %s75
    %s93 = sphi 0, %s93
    %s95 = sphi 0, %s93
    %s96 = sphi 0, %s95
    %s110 = sphi 0, %s96
    %s114 = sphi 0, %s114
    %s116 = sphi 0, %s114
    %s117 = sphi 0, %s116
    %s131 = sphi 0, %s117
    %s135 = sphi 0, %s135
    %s137 = sphi 0, %s135
    %s138 = sphi 0, %s137
    %s152 = sphi 0, %s138
    %s156 = sphi 0, %s156
    %s158 = sphi 0, %s156
    %s159 = sphi 0, %s158
    %s173 = sphi 0, %s159
    %s177 = sphi 0, %s177
    %s179 = sphi 0, %s177
    %s180 = sphi 0, %s179
    %s194 = sphi 0, %s180
    %s198 = sphi 0, %s198
    %s200 = sphi 0, %s198
    %s201 = sphi 0, %s200
    %s215 = sphi 0, %s201
    %s221 = sphi 0, %s223
    %s224 = sphi 0, %s221
    %s225 = sphi 0, %s224
    %s241 = sphi 0, %s225
  $region4: #{_model_forward_impl.1} parent=0 // loop_header_branch
    %20 = sbr.rel (%p18) target = $region8
  $region5: #{_model_forward_impl.1} parent=0 // loop_body
    %s22 = ssub.s32 %s17, 1
    %s23 = ssub.s32 %s17, 2
    %s24 = sadd.s32 %s17, 1
    %s25 = ssub.s32 %s17, %s24
    %p26 = scmp.eq.s32.totalorder %s25, 0
    %s28 = sadd.s32 %s27, 1
    %s29 = scalar_select %p26, %s27, %s28
    %p32 = pneg %p26
    %p33 = scmp.eq.s32.totalorder %s17, 1
    %p34 = por %p32, %p33
    %p35 = scmp.ne.s32.totalorder %s27, %s30
    %p36 = scmp.eq.s32.totalorder %s17, 0
    %p37 = por %p35, %p36
    %p38 = scmp.ne.s32.totalorder %s27, %s30
    %p39 = scmp.eq.s32.totalorder %s22, 1
    %p40 = por %p38, %p39
    %p41 = scmp.ne.s32.totalorder %s30, %s31
    %p42 = scmp.eq.s32.totalorder %s22, 0
    %p43 = por %p41, %p42
    %p44 = scmp.ne.s32.totalorder %s30, %s31
    %p45 = scmp.eq.s32.totalorder %s23, 1
    %p46 = por %p44, %p45
    %p48 = scmp.ne.s32.totalorder %s31, %s47
    %p49 = scmp.eq.s32.totalorder %s23, 0
    %p50 = por %p48, %p49
    %s52 = sadd.s32 %s51, 1
    %p55 = scmp.eq.s32.totalorder %s17, 1
    %p56 = scmp.ne.s32.totalorder %s51, %s53
    %p57 = scmp.eq.s32.totalorder %s17, 0
    %p58 = por %p56, %p57
    %p59 = scmp.ne.s32.totalorder %s51, %s53
    %p60 = scmp.eq.s32.totalorder %s22, 1
    %p61 = por %p59, %p60
    %p62 = scmp.ne.s32.totalorder %s53, %s54
    %p63 = scmp.eq.s32.totalorder %s22, 0
    %p64 = por %p62, %p63
    %p65 = scmp.ne.s32.totalorder %s53, %s54
    %p66 = scmp.eq.s32.totalorder %s23, 1
    %p67 = por %p65, %p66
    %p69 = scmp.ne.s32.totalorder %s54, %s68
    %p70 = scmp.eq.s32.totalorder %s23, 0
    %p71 = por %p69, %p70
    %s73 = sadd.s32 %s72, 1
    %p76 = scmp.eq.s32.totalorder %s17, 1
    %p77 = scmp.ne.s32.totalorder %s72, %s74
    %p78 = scmp.eq.s32.totalorder %s17, 0
    %p79 = por %p77, %p78
    %p80 = scmp.ne.s32.totalorder %s72, %s74
    %p81 = scmp.eq.s32.totalorder %s22, 1
    %p82 = por %p80, %p81
    %p83 = scmp.ne.s32.totalorder %s74, %s75
    %p84 = scmp.eq.s32.totalorder %s22, 0
    %p85 = por %p83, %p84
    %p86 = scmp.ne.s32.totalorder %s74, %s75
    %p87 = scmp.eq.s32.totalorder %s23, 1
    %p88 = por %p86, %p87
    %p90 = scmp.ne.s32.totalorder %s75, %s89
    %p91 = scmp.eq.s32.totalorder %s23, 0
    %p92 = por %p90, %p91
    %s94 = sadd.s32 %s93, 1
    %p97 = scmp.eq.s32.totalorder %s17, 1
    %p98 = scmp.ne.s32.totalorder %s93, %s95
    %p99 = scmp.eq.s32.totalorder %s17, 0
    %p100 = por %p98, %p99
    %p101 = scmp.ne.s32.totalorder %s93, %s95
    %p102 = scmp.eq.s32.totalorder %s22, 1
    %p103 = por %p101, %p102
    %p104 = scmp.ne.s32.totalorder %s95, %s96
    %p105 = scmp.eq.s32.totalorder %s22, 0
    %p106 = por %p104, %p105
    %p107 = scmp.ne.s32.totalorder %s95, %s96
    %p108 = scmp.eq.s32.totalorder %s23, 1
    %p109 = por %p107, %p108
    %p111 = scmp.ne.s32.totalorder %s96, %s110
    %p112 = scmp.eq.s32.totalorder %s23, 0
    %p113 = por %p111, %p112
    %s115 = sadd.s32 %s114, 1
    %p118 = scmp.eq.s32.totalorder %s17, 1
    %p119 = scmp.ne.s32.totalorder %s114, %s116
    %p120 = scmp.eq.s32.totalorder %s17, 0
    %p121 = por %p119, %p120
    %p122 = scmp.ne.s32.totalorder %s114, %s116
    %p123 = scmp.eq.s32.totalorder %s22, 1
    %p124 = por %p122, %p123
    %p125 = scmp.ne.s32.totalorder %s116, %s117
    %p126 = scmp.eq.s32.totalorder %s22, 0
    %p127 = por %p125, %p126
    %p128 = scmp.ne.s32.totalorder %s116, %s117
    %p129 = scmp.eq.s32.totalorder %s23, 1
    %p130 = por %p128, %p129
    %p132 = scmp.ne.s32.totalorder %s117, %s131
    %p133 = scmp.eq.s32.totalorder %s23, 0
    %p134 = por %p132, %p133
    %s136 = sadd.s32 %s135, 1
    %p139 = scmp.eq.s32.totalorder %s17, 1
    %p140 = scmp.ne.s32.totalorder %s135, %s137
    %p141 = scmp.eq.s32.totalorder %s17, 0
    %p142 = por %p140, %p141
    %p143 = scmp.ne.s32.totalorder %s135, %s137
    %p144 = scmp.eq.s32.totalorder %s22, 1
    %p145 = por %p143, %p144
    %p146 = scmp.ne.s32.totalorder %s137, %s138
    %p147 = scmp.eq.s32.totalorder %s22, 0
    %p148 = por %p146, %p147
    %p149 = scmp.ne.s32.totalorder %s137, %s138
    %p150 = scmp.eq.s32.totalorder %s23, 1
    %p151 = por %p149, %p150
    %p153 = scmp.ne.s32.totalorder %s138, %s152
    %p154 = scmp.eq.s32.totalorder %s23, 0
    %p155 = por %p153, %p154
    %s157 = sadd.s32 %s156, 1
    %p160 = scmp.eq.s32.totalorder %s17, 1
    %p161 = scmp.ne.s32.totalorder %s156, %s158
    %p162 = scmp.eq.s32.totalorder %s17, 0
    %p163 = por %p161, %p162
    %p164 = scmp.ne.s32.totalorder %s156, %s158
    %p165 = scmp.eq.s32.totalorder %s22, 1
    %p166 = por %p164, %p165
    %p167 = scmp.ne.s32.totalorder %s158, %s159
    %p168 = scmp.eq.s32.totalorder %s22, 0
    %p169 = por %p167, %p168
    %p170 = scmp.ne.s32.totalorder %s158, %s159
    %p171 = scmp.eq.s32.totalorder %s23, 1
    %p172 = por %p170, %p171
    %p174 = scmp.ne.s32.totalorder %s159, %s173
    %p175 = scmp.eq.s32.totalorder %s23, 0
    %p176 = por %p174, %p175
    %s178 = sadd.s32 %s177, 1
    %p181 = scmp.eq.s32.totalorder %s17, 1
    %p182 = scmp.ne.s32.totalorder %s177, %s179
    %p183 = scmp.eq.s32.totalorder %s17, 0
    %p184 = por %p182, %p183
    %p185 = scmp.ne.s32.totalorder %s177, %s179
    %p186 = scmp.eq.s32.totalorder %s22, 1
    %p187 = por %p185, %p186
    %p188 = scmp.ne.s32.totalorder %s179, %s180
    %p189 = scmp.eq.s32.totalorder %s22, 0
    %p190 = por %p188, %p189
    %p191 = scmp.ne.s32.totalorder %s179, %s180
    %p192 = scmp.eq.s32.totalorder %s23, 1
    %p193 = por %p191, %p192
    %p195 = scmp.ne.s32.totalorder %s180, %s194
    %p196 = scmp.eq.s32.totalorder %s23, 0
    %p197 = por %p195, %p196
    %s199 = sadd.s32 %s198, 1
    %p202 = scmp.eq.s32.totalorder %s17, 1
    %p203 = scmp.ne.s32.totalorder %s198, %s200
    %p204 = scmp.eq.s32.totalorder %s17, 0
    %p205 = por %p203, %p204
    %p206 = scmp.ne.s32.totalorder %s198, %s200
    %p207 = scmp.eq.s32.totalorder %s22, 1
    %p208 = por %p206, %p207
    %p209 = scmp.ne.s32.totalorder %s200, %s201
    %p210 = scmp.eq.s32.totalorder %s22, 0
    %p211 = por %p209, %p210
    %p212 = scmp.ne.s32.totalorder %s200, %s201
    %p213 = scmp.eq.s32.totalorder %s23, 1
    %p214 = por %p212, %p213
    %p216 = scmp.ne.s32.totalorder %s201, %s215
    %p217 = scmp.eq.s32.totalorder %s23, 0
    %p218 = por %p216, %p217
    %s219 = ssub.s32 %s17, %s24
    %p220 = scmp.eq.s32.totalorder %s219, 0
    %s222 = sadd.s32 %s221, 1
    %s223 = scalar_select %p220, %s221, %s222
    %p226 = pneg %p220
    %p227 = scmp.eq.s32.totalorder %s17, 1
    %p228 = por %p226, %p227
    %p229 = scmp.ne.s32.totalorder %s221, %s224
    %p230 = scmp.eq.s32.totalorder %s17, 0
    %p231 = por %p229, %p230
    %p232 = scmp.ne.s32.totalorder %s221, %s224
    %p233 = scmp.eq.s32.totalorder %s22, 1
    %p234 = por %p232, %p233
    %p235 = scmp.ne.s32.totalorder %s224, %s225
    %p236 = scmp.eq.s32.totalorder %s22, 0
    %p237 = por %p235, %p236
    %p238 = scmp.ne.s32.totalorder %s224, %s225
    %p239 = scmp.eq.s32.totalorder %s23, 1
    %p240 = por %p238, %p239
    %p242 = scmp.ne.s32.totalorder %s225, %s241
    %p243 = scmp.eq.s32.totalorder %s23, 0
    %p244 = por %p242, %p243
    %p245 = scmp.le.s32.totalorder 1, %s17
    %p246 = scmp.lt.s32.totalorder %s17, 3
    %p247 = pnand %p245, %p246
    %p248 = pneg %p247
    // Predicated region
    $region9: #{_model_forward_impl.1} parent=5 // pred_check
      _
    $region10: #{_model_forward_impl.1} parent=5 // pred_check_branch
      %250 = sbr.rel (%p247) target = $region12
    $region11: #{_model_forward_impl.1} parent=5 // pred_region
      %s251 = ssub.s32 %s17, 1
      // Predicated region
      $region13: #{_model_forward_impl.1} parent=11 // pred_check
        %p252 = pneg %p64
      $region14: #{_model_forward_impl.1} parent=11 // pred_check_branch
        %254 = sbr.rel (%p252) target = $region16
      $region15: #{_model_forward_impl.1} parent=11 // pred_region
        _
      $region16: #{_model_forward_impl.1} parent=11 // pred_fallthru
        _
      // Predicated region
      $region17: #{_model_forward_impl.1} parent=11 // pred_check
        %p255 = pneg %p85
      $region18: #{_model_forward_impl.1} parent=11 // pred_check_branch
        %257 = sbr.rel (%p255) target = $region20
      $region19: #{_model_forward_impl.1} parent=11 // pred_region
        _
      $region20: #{_model_forward_impl.1} parent=11 // pred_fallthru
        _
      // Predicated region
      $region21: #{_model_forward_impl.1} parent=11 // pred_check
        %p258 = pneg %p106
      $region22: #{_model_forward_impl.1} parent=11 // pred_check_branch
        %260 = sbr.rel (%p258) target = $region24
      $region23: #{_model_forward_impl.1} parent=11 // pred_region
        _
      $region24: #{_model_forward_impl.1} parent=11 // pred_fallthru
        _
      // Predicated region
      $region25: #{_model_forward_impl.1} parent=11 // pred_check
        %p261 = pneg %p127
      $region26: #{_model_forward_impl.1} parent=11 // pred_check_branch
        %263 = sbr.rel (%p261) target = $region28
      $region27: #{_model_forward_impl.1} parent=11 // pred_region
        _
      $region28: #{_model_forward_impl.1} parent=11 // pred_fallthru
        _
      // Predicated region
      $region29: #{_model_forward_impl.1} parent=11 // pred_check
        %p264 = pneg %p148
      $region30: #{_model_forward_impl.1} parent=11 // pred_check_branch
        %266 = sbr.rel (%p264) target = $region32
      $region31: #{_model_forward_impl.1} parent=11 // pred_region
        _
      $region32: #{_model_forward_impl.1} parent=11 // pred_fallthru
        _
      // Predicated region
      $region33: #{_model_forward_impl.1} parent=11 // pred_check
        %p267 = pneg %p169
      $region34: #{_model_forward_impl.1} parent=11 // pred_check_branch
        %269 = sbr.rel (%p267) target = $region36
      $region35: #{_model_forward_impl.1} parent=11 // pred_region
        _
      $region36: #{_model_forward_impl.1} parent=11 // pred_fallthru
        _
      // Predicated region
      $region37: #{_model_forward_impl.1} parent=11 // pred_check
        %p270 = pneg %p190
      $region38: #{_model_forward_impl.1} parent=11 // pred_check_branch
        %272 = sbr.rel (%p270) target = $region40
      $region39: #{_model_forward_impl.1} parent=11 // pred_region
        _
      $region40: #{_model_forward_impl.1} parent=11 // pred_fallthru
        _
      // Predicated region
      $region41: #{_model_forward_impl.1} parent=11 // pred_check
        %p273 = pneg %p211
      $region42: #{_model_forward_impl.1} parent=11 // pred_check_branch
        %275 = sbr.rel (%p273) target = $region44
      $region43: #{_model_forward_impl.1} parent=11 // pred_region
        _
      $region44: #{_model_forward_impl.1} parent=11 // pred_fallthru
        _
    $region12: #{_model_forward_impl.1} parent=5 // pred_fallthru
      _
    %p276 = scmp.lt.s32.totalorder %s17, 2
    // Predicated region
    $region45: #{_model_forward_impl.1} parent=5 // pred_check
      %p277 = pneg %p276
    $region46: #{_model_forward_impl.1} parent=5 // pred_check_branch
      %279 = sbr.rel (%p277) target = $region48
    $region47: #{_model_forward_impl.1} parent=5 // pred_region
      // Predicated region
      $region49: #{_model_forward_impl.1} parent=47 // pred_check
        %p280 = pneg %p37
      $region50: #{_model_forward_impl.1} parent=47 // pred_check_branch
        %282 = sbr.rel (%p280) target = $region52
      $region51: #{_model_forward_impl.1} parent=47 // pred_region
        %p283 = scmp.lt.s32.totalorder %s17, 1
        %s284 = scalar_select %p283, %s17, 1
        %s285 = smul.addr %s284, 8
        %s286 = scalar_lea.vmem %s0, %s285
      $region52: #{_model_forward_impl.1} parent=47 // pred_fallthru
        _
    $region48: #{_model_forward_impl.1} parent=5 // pred_fallthru
      _
    %p287 = scmp.le.s32.totalorder 1, %s17
    %p288 = scmp.lt.s32.totalorder %s17, 3
    %p289 = pnand %p287, %p288
    %p290 = pneg %p289
    // Predicated region
    $region53: #{_model_forward_impl.1} parent=5 // pred_check
      _
    $region54: #{_model_forward_impl.1} parent=5 // pred_check_branch
      %292 = sbr.rel (%p289) target = $region56
    $region55: #{_model_forward_impl.1} parent=5 // pred_region
      %s293 = ssub.s32 %s17, 1
      %p294 = scmp.lt.s32.totalorder %s22, 1
      %s295 = scalar_select %p294, %s22, 1
      %s296 = smul.addr %s295, 8
      %s297 = scalar_lea.vmem %s0, %s296
      %p298 = pneg %p43
      %p299 = pneg %p40
      %p300 = pneg %p64
      %p301 = pneg %p61
      %p302 = pneg %p85
      %p303 = pneg %p82
      %p304 = pneg %p106
      %p305 = pneg %p103
      %p306 = pneg %p127
      %p307 = pneg %p124
      %p308 = pneg %p148
      %p309 = pneg %p145
      %p310 = pneg %p169
      %p311 = pneg %p166
      %p312 = pneg %p190
      %p313 = pneg %p187
      %p314 = pneg %p211
      %p315 = pneg %p208
      %p316 = pneg %p237
      %p317 = pneg %p234
      %p318 = scmp.lt.s32.totalorder %s22, 1
      %s319 = scalar_select %p318, %s22, 1
      %s320 = smul.addr %s319, 8
      %s321 = scalar_lea.vmem %s9, %s320
      %p322 = scmp.lt.s32.totalorder %s22, 1
      %s323 = scalar_select %p322, %s22, 1
      %s324 = smul.addr %s323, 8
      %s325 = scalar_lea.vmem %s0, %s324
      %p326 = scmp.lt.s32.totalorder %s22, 1
      %s327 = scalar_select %p326, %s22, 1
      %s328 = smul.addr %s327, 8
      %s329 = scalar_lea.vmem %s9, %s328
      %v331 = vld [vmem:[%s325] sm:$0xff]
      %v332 = vpack.c.bf16 %v331, %v331
      %v333 = vld [vmem:[%s1] sm:$0xf]
      %v334 = vld [vmem:[%s1 + $0x4] sm:$0xf]
      %v335 = vld [vmem:[%s1 + $0x8] sm:$0xf]
      %v336 = vld [vmem:[%s1 + $0xc] sm:$0xf]
      %v337 = vld [vmem:[%s2] sm:$0x1]
      %v339 = vperm.slane %v337, 0
      %v345 = vunpack.c.l.b16 %v333
      %v346 = vunpack.c.l.b16 %v334
      %v347 = vunpack.c.l.b16 %v335
      %v348 = vunpack.c.l.b16 %v336
      %v349 = vpack.c.b16 %v346, %v345
      %v350 = vpack.c.b16 %v348, %v347
      %vm353 = vcmask 261120
      %v355 = vsel %vm353, %v332, 0
      %357 = vmatpush.bf16.msra.mxu0 0
      %358 = vmatpush.bf16.msra.mxu0 0
      %359 = vmatpush.bf16.msra.mxu0 0
      %360 = vmatpush.bf16.msra.mxu0 0
      %361 = vmatpush.bf16.msra.mxu0 0
      %362 = vmatpush.bf16.msra.mxu0 0
      %363 = vmatpush.bf16.msra.mxu0 %v350
      %364 = vmatpush.bf16.msra.mxu0 %v349
      %365 = vmatmul.bf16.gmra.mxu0 %v355
      %v366 = vpop.f32.mrf.mxu0
      %v367 = vadd.f32 %v339, %v366
      %v368 = vpop.f32.mrf.mxu0
      %369 = vdwg.mxu0
      %v370 = vmax.f32 %v367, 0.0
      %v371 = vpack.c.bf16 %v370, %v370
      %v372 = vld [vmem:[%s3] sm:$0xf]
      %v373 = vld [vmem:[%s3 + $0x4] sm:$0xf]
      %v374 = vld [vmem:[%s3 + $0x8] sm:$0xf]
      %v375 = vld [vmem:[%s3 + $0xc] sm:$0xf]
      %v376 = vld [vmem:[%s3 + $0x10] sm:$0xf]
      %v377 = vld [vmem:[%s3 + $0x14] sm:$0xf]
      %v378 = vld [vmem:[%s3 + $0x18] sm:$0xf]
      %v379 = vld [vmem:[%s3 + $0x1c] sm:$0xf]
      %v380 = vld [vmem:[%s3 + $0x20] sm:$0xf]
      %v381 = vld [vmem:[%s3 + $0x24] sm:$0xf]
      %v382 = vld [vmem:[%s3 + $0x28] sm:$0xf]
      %v383 = vld [vmem:[%s3 + $0x2c] sm:$0xf]
      %v384 = vld [vmem:[%s3 + $0x30] sm:$0xf]
      %v385 = vld [vmem:[%s3 + $0x34] sm:$0xf]
      %v386 = vld [vmem:[%s3 + $0x38] sm:$0xf]
      %v387 = vld [vmem:[%s3 + $0x3c] sm:$0xf]
      %v388 = vld [vmem:[%s4] sm:$0x1]
      %v390 = vperm.slane %v388, 0
      %v408 = vunpack.c.l.b16 %v372
      %v409 = vunpack.c.l.b16 %v373
      %v410 = vunpack.c.l.b16 %v374
      %v411 = vunpack.c.l.b16 %v375
      %v412 = vunpack.c.l.b16 %v376
      %v413 = vunpack.c.l.b16 %v377
      %v414 = vunpack.c.l.b16 %v378
      %v415 = vunpack.c.l.b16 %v379
      %v416 = vunpack.c.l.b16 %v380
      %v417 = vunpack.c.l.b16 %v381
      %v418 = vunpack.c.l.b16 %v382
      %v419 = vunpack.c.l.b16 %v383
      %v420 = vunpack.c.l.b16 %v384
      %v421 = vunpack.c.l.b16 %v385
      %v422 = vunpack.c.l.b16 %v386
      %v423 = vunpack.c.l.b16 %v387
      %v424 = vpack.c.b16 %v409, %v408
      %v425 = vpack.c.b16 %v411, %v410
      %v426 = vpack.c.b16 %v413, %v412
      %v427 = vpack.c.b16 %v415, %v414
      %v428 = vpack.c.b16 %v417, %v416
      %v429 = vpack.c.b16 %v419, %v418
      %v430 = vpack.c.b16 %v421, %v420
      %v431 = vpack.c.b16 %v423, %v422
      %440 = vmatpush.bf16.msra.mxu0 %v431
      %441 = vmatpush.bf16.msra.mxu0 %v430
      %442 = vmatpush.bf16.msra.mxu0 %v429
      %443 = vmatpush.bf16.msra.mxu0 %v428
      %444 = vmatpush.bf16.msra.mxu0 %v427
      %445 = vmatpush.bf16.msra.mxu0 %v426
      %446 = vmatpush.bf16.msra.mxu0 %v425
      %447 = vmatpush.bf16.msra.mxu0 %v424
      %448 = vmatmul.bf16.gmra.mxu0 %v371
      %v449 = vpop.f32.mrf.mxu0
      %v450 = vadd.f32 %v390, %v449
      %v451 = vpop.f32.mrf.mxu0
      %452 = vdwg.mxu0
      %v453 = vmax.f32 %v450, 0.0
      %v454 = vpack.c.bf16 %v453, %v453
      %v455 = vld [vmem:[%s5] sm:$0xf]
      %v456 = vld [vmem:[%s5 + $0x4] sm:$0xf]
      %v457 = vld [vmem:[%s5 + $0x8] sm:$0xf]
      %v458 = vld [vmem:[%s5 + $0xc] sm:$0xf]
      %v459 = vld [vmem:[%s5 + $0x10] sm:$0xf]
      %v460 = vld [vmem:[%s5 + $0x14] sm:$0xf]
      %v461 = vld [vmem:[%s5 + $0x18] sm:$0xf]
      %v462 = vld [vmem:[%s5 + $0x1c] sm:$0xf]
      %v463 = vld [vmem:[%s6] sm:$0x1]
      %v465 = vperm.slane %v463, 0
      %v475 = vunpack.c.l.b16 %v455
      %v476 = vunpack.c.l.b16 %v456
      %v477 = vunpack.c.l.b16 %v457
      %v478 = vunpack.c.l.b16 %v458
      %v479 = vunpack.c.l.b16 %v459
      %v480 = vunpack.c.l.b16 %v460
      %v481 = vunpack.c.l.b16 %v461
      %v482 = vunpack.c.l.b16 %v462
      %v483 = vpack.c.b16 %v476, %v475
      %v484 = vpack.c.b16 %v478, %v477
      %v485 = vpack.c.b16 %v480, %v479
      %v486 = vpack.c.b16 %v482, %v481
      %vm491 = vcmask 523264
      %v493 = vsel %vm491, %v454, 0
      %495 = vmatpush.bf16.msra.mxu0 0
      %496 = vmatpush.bf16.msra.mxu0 0
      %497 = vmatpush.bf16.msra.mxu0 0
      %498 = vmatpush.bf16.msra.mxu0 0
      %499 = vmatpush.bf16.msra.mxu0 %v486
      %500 = vmatpush.bf16.msra.mxu0 %v485
      %501 = vmatpush.bf16.msra.mxu0 %v484
      %502 = vmatpush.bf16.msra.mxu0 %v483
      %503 = vmatmul.bf16.gmra.mxu0 %v493
      %v504 = vpop.f32.mrf.mxu0
      %v505 = vadd.f32 %v465, %v504
      %v506 = vpop.f32.mrf.mxu0
      %507 = vdwg.mxu0
      %v508 = vmax.f32 %v505, 0.0
      %v509 = vpack.c.bf16 %v508, %v508
      %v510 = vld [vmem:[%s7] sm:$0xf]
      %v511 = vld [vmem:[%s7 + $0x4] sm:$0xf]
      %v512 = vld [vmem:[%s7 + $0x8] sm:$0xf]
      %v513 = vld [vmem:[%s7 + $0xc] sm:$0xf]
      %v514 = vld [vmem:[#allocation2] sm:$0x1]
      %v516 = vperm.slane %v514, 0
      %v522 = vunpack.c.l.b16 %v510
      %v523 = vunpack.c.l.b16 %v511
      %v524 = vunpack.c.l.b16 %v512
      %v525 = vunpack.c.l.b16 %v513
      %v526 = vpack.c.b16 %v523, %v522
      %v527 = vpack.c.b16 %v525, %v524
      %v531 = vsel %vm353, %v509, 0
      %533 = vmatpush.bf16.msra.mxu0 0
      %534 = vmatpush.bf16.msra.mxu0 0
      %535 = vmatpush.bf16.msra.mxu0 0
      %536 = vmatpush.bf16.msra.mxu0 0
      %537 = vmatpush.bf16.msra.mxu0 0
      %538 = vmatpush.bf16.msra.mxu0 0
      %539 = vmatpush.bf16.msra.mxu0 %v527
      %540 = vmatpush.bf16.msra.mxu0 %v526
      %541 = vmatmul.bf16.gmra.mxu0 %v531
      %v542 = vpop.f32.mrf.mxu0
      %v543 = vadd.f32 %v516, %v542
      %v544 = vpop.f32.mrf.mxu0
      %545 = vdwg.mxu0
      %vm546 = vcmask 7168
      %547 = vst.msk [vmem:[%s329] sm:$0xff] %vm546, %v543
      %p548 = scmp.lt.s32.totalorder %s22, 1
      %s549 = scalar_select %p548, %s22, 1
      %s550 = smul.addr %s549, 8
      %s551 = scalar_lea.vmem %s9, %s550
      // Predicated region
      $region57: #{_model_forward_impl.1} parent=55 // pred_check
        %p552 = pneg %p234
      $region58: #{_model_forward_impl.1} parent=55 // pred_check_branch
        %554 = sbr.rel (%p552) target = $region60
      $region59: #{_model_forward_impl.1} parent=55 // pred_region
        _
      $region60: #{_model_forward_impl.1} parent=55 // pred_fallthru
        _
    $region56: #{_model_forward_impl.1} parent=5 // pred_fallthru
      _
    %p555 = scmp.le.s32.totalorder 2, %s17
    // Predicated region
    $region61: #{_model_forward_impl.1} parent=5 // pred_check
      %p556 = pneg %p555
    $region62: #{_model_forward_impl.1} parent=5 // pred_check_branch
      %558 = sbr.rel (%p556) target = $region64
    $region63: #{_model_forward_impl.1} parent=5 // pred_region
      %s559 = ssub.s32 %s17, 2
      // Predicated region
      $region65: #{_model_forward_impl.1} parent=63 // pred_check
        %p560 = pneg %p240
      $region66: #{_model_forward_impl.1} parent=63 // pred_check_branch
        %562 = sbr.rel (%p560) target = $region68
      $region67: #{_model_forward_impl.1} parent=63 // pred_region
        %p563 = scmp.lt.s32.totalorder %s23, 1
        %s564 = scalar_select %p563, %s23, 1
        %s565 = smul.addr %s564, 8
        %s566 = scalar_lea.vmem %s9, %s565
      $region68: #{_model_forward_impl.1} parent=63 // pred_fallthru
        _
    $region64: #{_model_forward_impl.1} parent=5 // pred_fallthru
      _
  $region6: #{_model_forward_impl.1} parent=0 // loop_footer
    %s21 = sadd.s32 1, %s17
  $region7: #{_model_forward_impl.1} parent=0 // loop_footer_branch
    %16 = sbr.rel target = $region3
  $region8: #{_model_forward_impl.1} parent=0 // loop_exit
    _

</llo_original>
